<compile_context>
chip_gen: v7x
topology: tpu7x:2x2x1
jax: 0.10.0
libtpu: 0.0.40
codegen_flags: <defaults>
</compile_context>

<pallas_src>
import functools

import jax
import jax.numpy as jnp
from jax.experimental import pallas as pl
from jax.experimental.pallas import tpu as pltpu

HIDDEN = 200  # fixed by the PyTorch module (fc1/fc2 output 200)


def _mlp_head_kernel(x_ref, w1_ref, b1_ref, w2_ref, b2_ref, wp_ref, bp_ref, o_ref):
    """Fused fc1 -> relu -> fc2 -> relu -> predictor for one batch tile."""
    x = x_ref[...]
    h1 = jnp.dot(x, w1_ref[...], preferred_element_type=jnp.float32) + b1_ref[...]
    h1 = jnp.maximum(h1, 0.0)
    h2 = jnp.dot(h1, w2_ref[...], preferred_element_type=jnp.float32) + b2_ref[...]
    h2 = jnp.maximum(h2, 0.0)
    out = jnp.dot(h2, wp_ref[...], preferred_element_type=jnp.float32) + bp_ref[...]
    o_ref[...] = out.astype(o_ref.dtype)


def _mlp_nohead_kernel(x_ref, w1_ref, b1_ref, w2_ref, b2_ref, o_ref):
    """Fused fc1 -> relu -> fc2 -> relu (ignore_head=True path)."""
    x = x_ref[...]
    h1 = jnp.dot(x, w1_ref[...], preferred_element_type=jnp.float32) + b1_ref[...]
    h1 = jnp.maximum(h1, 0.0)
    h2 = jnp.dot(h1, w2_ref[...], preferred_element_type=jnp.float32) + b2_ref[...]
    h2 = jnp.maximum(h2, 0.0)
    o_ref[...] = h2.astype(o_ref.dtype)


def _round_up(n, m):
    return ((n + m - 1) // m) * m


def _resident_spec(shape):
    """Whole-array block, same block every grid step -> stays VMEM-resident."""
    return pl.BlockSpec(shape, lambda i: tuple(0 for _ in shape))


@functools.partial(jax.jit, static_argnames=("ignore_head", "block_rows"))
def mlp_forward(x, params, *, ignore_head=False, block_rows=512):
    """MLP_Model forward pass as a single fused, batch-tiled Pallas kernel."""
    b, d = x.shape
    w1, b1, w2, b2, wp, bp = (
        params["w1"], params["b1"], params["w2"], params["b2"],
        params["wp"], params["bp"],
    )

    if ignore_head:
        kernel = _mlp_nohead_kernel
        weights = (w1, b1, w2, b2)
        out_dim = w2.shape[1]
    else:
        kernel = _mlp_head_kernel
        weights = (w1, b1, w2, b2, wp, bp)
        out_dim = wp.shape[1]

    # Batch tile: multiple of 8 sublanes, no bigger than the (padded) batch.
    tm = max(8, min(_round_up(block_rows, 8), _round_up(b, 8)))
    grid = (pl.cdiv(b, tm),)

    flops = 2 * b * (d * HIDDEN + HIDDEN * HIDDEN + HIDDEN * out_dim)
    bytes_accessed = 4 * (
        b * d
        + b * out_dim
        + sum(int(w.size) for w in weights)
    )
    cost = pl.CostEstimate(flops=flops, transcendentals=0,
                           bytes_accessed=bytes_accessed)

    in_specs = [pl.BlockSpec((tm, d), lambda i: (i, 0))]
    in_specs += [_resident_spec(w.shape) for w in weights]

    return pl.pallas_call(
        kernel,
        out_shape=jax.ShapeDtypeStruct((b, out_dim), x.dtype),
        grid=grid,
        in_specs=in_specs,
        out_specs=pl.BlockSpec((tm, out_dim), lambda i: (i, 0)),
        compiler_params=pltpu.CompilerParams(
            dimension_semantics=("parallel",)),
        cost_estimate=cost,
    )(x, *weights)


def init_params(key, input_dim, target_class_num, dtype=jnp.float32):
    """Deterministic synthetic init (PyTorch-Linear-like uniform fan_in init)."""
    keys = jax.random.split(key, 6)

    def lin(kw, kb, fan_in, fan_out):
        bound = 1.0 / jnp.sqrt(jnp.asarray(fan_in, dtype))
        w = jax.random.uniform(kw, (fan_in, fan_out), dtype, -bound, bound)
        bias = jax.random.uniform(kb, (1, fan_out), dtype, -bound, bound)
        return w, bias

    w1, b1 = lin(keys[0], keys[1], input_dim, HIDDEN)
    w2, b2 = lin(keys[2], keys[3], HIDDEN, HIDDEN)
    wp, bp = lin(keys[4], keys[5], HIDDEN, target_class_num)
    return {"w1": w1, "b1": b1, "w2": w2, "b2": b2, "wp": wp, "bp": bp}


def reference_forward(x, params, ignore_head=False):
    h1 = jnp.maximum(x @ params["w1"] + params["b1"], 0.0)
    h2 = jnp.maximum(h1 @ params["w2"] + params["b2"], 0.0)
    if ignore_head:
        return h2
    return h2 @ params["wp"] + params["bp"]


if __name__ == "__main__":
    key = jax.random.PRNGKey(0)
    batch, input_dim, num_classes = 8, 32, 10

    k_x, k_p, k_x2 = jax.random.split(key, 3)
    x = jax.random.normal(k_x, (batch, input_dim), jnp.float32)
    params = init_params(k_p, input_dim, num_classes)

    # Full model (predictor head applied), single grid step.
    out = jax.block_until_ready(mlp_forward(x, params, ignore_head=False))
    ref = reference_forward(x, params, ignore_head=False)
    assert out.shape == (batch, num_classes)
    assert jnp.allclose(out, ref, atol=1e-4, rtol=1e-4)

    # ignore_head=True path (features only).
    feat = jax.block_until_ready(mlp_forward(x, params, ignore_head=True))
    ref_feat = reference_forward(x, params, ignore_head=True)
    assert feat.shape == (batch, HIDDEN)
    assert jnp.allclose(feat, ref_feat, atol=1e-4, rtol=1e-4)

    # Multi-step batch grid with a padded final tile (B=200, TM=64 -> 4 steps).
    batch2 = 200
    x2 = jax.random.normal(k_x2, (batch2, input_dim), jnp.float32)
    out2 = jax.block_until_ready(
        mlp_forward(x2, params, ignore_head=False, block_rows=64))
    ref2 = reference_forward(x2, params, ignore_head=False)
    assert out2.shape == (batch2, num_classes)
    assert jnp.allclose(out2, ref2, atol=1e-4, rtol=1e-4)

    print("KERNEL_OK")
</pallas_src>

<mosaic_0001>
module attributes {stable_mosaic.version = 11 : i64} {
  func.func @_mlp_head_kernel(%arg0: i32, %arg1: memref<8x32xf32, #tpu.memory_space<vmem>>, %arg2: memref<32x200xf32, #tpu.memory_space<vmem>>, %arg3: memref<1x200xf32, #tpu.memory_space<vmem>>, %arg4: memref<200x200xf32, #tpu.memory_space<vmem>>, %arg5: memref<1x200xf32, #tpu.memory_space<vmem>>, %arg6: memref<200x10xf32, #tpu.memory_space<vmem>>, %arg7: memref<1x10xf32, #tpu.memory_space<vmem>>, %arg8: memref<8x10xf32, #tpu.memory_space<vmem>>) attributes {dimension_semantics = [#tpu.dimension_semantics<parallel>], iteration_bounds = array<i64: 1>, scalar_prefetch = 0 : i64, scratch_operands = 0 : i64, tpu.core_type = #tpu.core_type<tc>, window_params = [{transform_indices = @transform_0, window_bounds = array<i64: 8, 32>}, {pipeline_mode = #tpu.pipeline_mode<synchronous>, transform_indices = @transform_1, window_bounds = array<i64: 32, 200>}, {pipeline_mode = #tpu.pipeline_mode<synchronous>, transform_indices = @transform_2, window_bounds = array<i64: 1, 200>}, {pipeline_mode = #tpu.pipeline_mode<synchronous>, transform_indices = @transform_3, window_bounds = array<i64: 200, 200>}, {pipeline_mode = #tpu.pipeline_mode<synchronous>, transform_indices = @transform_4, window_bounds = array<i64: 1, 200>}, {pipeline_mode = #tpu.pipeline_mode<synchronous>, transform_indices = @transform_5, window_bounds = array<i64: 200, 10>}, {pipeline_mode = #tpu.pipeline_mode<synchronous>, transform_indices = @transform_6, window_bounds = array<i64: 1, 10>}, {transform_indices = @transform_7, window_bounds = array<i64: 8, 10>}]} {
    %c0 = arith.constant 0 : index
    %c0_0 = arith.constant 0 : index
    %0 = vector.load %arg1[%c0, %c0_0] : memref<8x32xf32, #tpu.memory_space<vmem>>, vector<8x32xf32>
    %c0_1 = arith.constant 0 : index
    %c0_2 = arith.constant 0 : index
    %1 = vector.load %arg2[%c0_1, %c0_2] : memref<32x200xf32, #tpu.memory_space<vmem>>, vector<32x200xf32>
    %cst = arith.constant dense<0.000000e+00> : vector<8x200xf32>
    %2 = tpu.matmul %0, %1, %cst {dimension_numbers = #tpu.dot_dimension_numbers<[1], [0], [0], [1], [0, 0, 1, 1], [], []>} : vector<8x32xf32>, vector<32x200xf32>, vector<8x200xf32> -> vector<8x200xf32>
    %c0_3 = arith.constant 0 : index
    %c0_4 = arith.constant 0 : index
    %3 = vector.load %arg3[%c0_3, %c0_4] : memref<1x200xf32, #tpu.memory_space<vmem>>, vector<1x200xf32>
    %4 = vector.broadcast %3 : vector<1x200xf32> to vector<8x200xf32>
    %5 = arith.addf %2, %4 : vector<8x200xf32>
    %cst_5 = arith.constant 0.000000e+00 : f32
    %6 = vector.broadcast %cst_5 : f32 to vector<8x200xf32>
    %7 = arith.maximumf %5, %6 : vector<8x200xf32>
    %c0_6 = arith.constant 0 : index
    %c0_7 = arith.constant 0 : index
    %8 = vector.load %arg4[%c0_6, %c0_7] : memref<200x200xf32, #tpu.memory_space<vmem>>, vector<200x200xf32>
    %cst_8 = arith.constant dense<0.000000e+00> : vector<8x200xf32>
    %9 = tpu.matmul %7, %8, %cst_8 {dimension_numbers = #tpu.dot_dimension_numbers<[1], [0], [0], [1], [0, 0, 1, 1], [], []>} : vector<8x200xf32>, vector<200x200xf32>, vector<8x200xf32> -> vector<8x200xf32>
    %c0_9 = arith.constant 0 : index
    %c0_10 = arith.constant 0 : index
    %10 = vector.load %arg5[%c0_9, %c0_10] : memref<1x200xf32, #tpu.memory_space<vmem>>, vector<1x200xf32>
    %11 = vector.broadcast %10 : vector<1x200xf32> to vector<8x200xf32>
    %12 = arith.addf %9, %11 : vector<8x200xf32>
    %cst_11 = arith.constant 0.000000e+00 : f32
    %13 = vector.broadcast %cst_11 : f32 to vector<8x200xf32>
    %14 = arith.maximumf %12, %13 : vector<8x200xf32>
    %c0_12 = arith.constant 0 : index
    %c0_13 = arith.constant 0 : index
    %15 = vector.load %arg6[%c0_12, %c0_13] : memref<200x10xf32, #tpu.memory_space<vmem>>, vector<200x10xf32>
    %cst_14 = arith.constant dense<0.000000e+00> : vector<8x10xf32>
    %16 = tpu.matmul %14, %15, %cst_14 {dimension_numbers = #tpu.dot_dimension_numbers<[1], [0], [0], [1], [0, 0, 1, 1], [], []>} : vector<8x200xf32>, vector<200x10xf32>, vector<8x10xf32> -> vector<8x10xf32>
    %c0_15 = arith.constant 0 : index
    %c0_16 = arith.constant 0 : index
    %17 = vector.load %arg7[%c0_15, %c0_16] : memref<1x10xf32, #tpu.memory_space<vmem>>, vector<1x10xf32>
    %18 = vector.broadcast %17 : vector<1x10xf32> to vector<8x10xf32>
    %19 = arith.addf %16, %18 : vector<8x10xf32>
    %c0_17 = arith.constant 0 : index
    %c0_18 = arith.constant 0 : index
    %20 = vector.load %arg8[%c0_17, %c0_18] : memref<8x10xf32, #tpu.memory_space<vmem>>, vector<8x10xf32>
    tpu.vector_store %arg8[%c0_17, %c0_18], %19 {strides = array<i32>} : memref<8x10xf32, #tpu.memory_space<vmem>>, vector<8x10xf32>,
    return
  }
  func.func @transform_0(%arg0: i32) -> (i32, i32) {
    %c0_i32 = arith.constant 0 : i32
    %c0_i32_0 = arith.constant 0 : i32
    return %arg0, %c0_i32 : i32, i32
  }
  func.func @transform_1(%arg0: i32) -> (i32, i32) {
    %c0_i32 = arith.constant 0 : i32
    %c0_i32_0 = arith.constant 0 : i32
    %c0_i32_1 = arith.constant 0 : i32
    return %c0_i32, %c0_i32_0 : i32, i32
  }
  func.func @transform_2(%arg0: i32) -> (i32, i32) {
    %c0_i32 = arith.constant 0 : i32
    %c0_i32_0 = arith.constant 0 : i32
    %c0_i32_1 = arith.constant 0 : i32
    return %c0_i32, %c0_i32_0 : i32, i32
  }
  func.func @transform_3(%arg0: i32) -> (i32, i32) {
    %c0_i32 = arith.constant 0 : i32
    %c0_i32_0 = arith.constant 0 : i32
    %c0_i32_1 = arith.constant 0 : i32
    return %c0_i32, %c0_i32_0 : i32, i32
  }
  func.func @transform_4(%arg0: i32) -> (i32, i32) {
    %c0_i32 = arith.constant 0 : i32
    %c0_i32_0 = arith.constant 0 : i32
    %c0_i32_1 = arith.constant 0 : i32
    return %c0_i32, %c0_i32_0 : i32, i32
  }
  func.func @transform_5(%arg0: i32) -> (i32, i32) {
    %c0_i32 = arith.constant 0 : i32
    %c0_i32_0 = arith.constant 0 : i32
    %c0_i32_1 = arith.constant 0 : i32
    return %c0_i32, %c0_i32_0 : i32, i32
  }
  func.func @transform_6(%arg0: i32) -> (i32, i32) {
    %c0_i32 = arith.constant 0 : i32
    %c0_i32_0 = arith.constant 0 : i32
    %c0_i32_1 = arith.constant 0 : i32
    return %c0_i32, %c0_i32_0 : i32, i32
  }
  func.func @transform_7(%arg0: i32) -> (i32, i32) {
    %c0_i32 = arith.constant 0 : i32
    %c0_i32_0 = arith.constant 0 : i32
    return %arg0, %c0_i32 : i32, i32
  }
}

</mosaic_0001>

<llo_original>
// kernel: mlp_forward.1
$region0: #{mlp_forward.1}
  #allocation0 [shape = 'u32[]', space=smem, size = 0x4, offset = 0x4, fixed_abs, tag = 'smem constant byte address 0x4 - core index']
  #allocation1 [shape = 'u32[144,128]{1,0:T(1,128)}', space=vmem, size = 0x12000, scoped, tag = 'internal scratch']
  %s0 = inlined_call_operand.vmem [shape: f32[8,32], index: 0, kind: input, shape index: {}]
  %s1 = inlined_call_operand.vmem [shape: f32[32,200], index: 1, kind: input, shape index: {}]
  %s2 = inlined_call_operand.vmem [shape: f32[1,200], index: 2, kind: input, shape index: {}]
  %s3 = inlined_call_operand.hbm [shape: f32[200,200], index: 3, kind: input, shape index: {}]
  %s4 = inlined_call_operand.vmem [shape: f32[1,200], index: 4, kind: input, shape index: {}]
  %s5 = inlined_call_operand.vmem [shape: f32[200,10], index: 5, kind: input, shape index: {}]
  %s6 = inlined_call_operand.vmem [shape: f32[1,10], index: 6, kind: input, shape index: {}]
  %s7 = inlined_call_operand.hbm [shape: f32[8,10], index: 7, kind: output, shape index: {}]
  %s8 = sld [smem:[#allocation0]]
  $region42: #{mlp_forward.1} parent=0
    _
  %s10 = ssub.s32 1, %s8
  %s11 = scalar_select 0, %s10, %s8
  $region1: #{mlp_forward.1} parent=0
    #allocation2 [shape = 'u8[204800]{0}', space=vmem, size = 0x32000, scoped, tag = 'input window, operand 3, single buffered']
    #allocation3 [shape = 's32[1]{0}', space=sflag, size = 0x4, scoped, tag = 'scoped memory for mlp_forward.1']
    #allocation4 [shape = 's32[1]{0}', space=sflag, size = 0x4, scoped, tag = 'scoped memory for mlp_forward.1']
    #allocation5 [shape = 'u8[4096]{0}', space=vmem, size = 0x1000, scoped, tag = 'output window, operand 0, single buffered']
    %12 = vsyncpa [#allocation3], 0
    %13 = vsyncpa [#allocation4], 0
    // Predicated region
    $region2: #{mlp_forward.1} parent=1 // pred_check
      _
    $region3: #{mlp_forward.1} parent=1 // pred_check_branch
      %15 = sbr.rel (0) target = $region5
    $region4: #{mlp_forward.1} parent=1 // pred_region
      _
    $region5: #{mlp_forward.1} parent=1 // pred_fallthru
      _
    // Predicated region
    $region6: #{mlp_forward.1} parent=1 // pred_check
      _
    $region7: #{mlp_forward.1} parent=1 // pred_check_branch
      %17 = sbr.rel (0) target = $region9
    $region8: #{mlp_forward.1} parent=1 // pred_region
      _
    $region9: #{mlp_forward.1} parent=1 // pred_fallthru
      _
    // Predicated region
    $region10: #{mlp_forward.1} parent=1 // pred_check
      _
    $region11: #{mlp_forward.1} parent=1 // pred_check_branch
      %19 = sbr.rel (0) target = $region13
    $region12: #{mlp_forward.1} parent=1 // pred_region
      _
    $region13: #{mlp_forward.1} parent=1 // pred_fallthru
      _
    // Predicated region
    $region14: #{mlp_forward.1} parent=1 // pred_check
      _
    $region15: #{mlp_forward.1} parent=1 // pred_check_branch
      %21 = sbr.rel (0) target = $region17
    $region16: #{mlp_forward.1} parent=1 // pred_region
      %s23 = ssub.s32 6400, 6400
      %24 = vsyncadd [#allocation3], %s23
      %s25 = sshll.u32 [#allocation2], 4
      %s26 = int_to_ptr.vmem [resolvable:$true] %s25
      %31 = dma.hbm_to_vmem [thread:$0]  %s3, 6400, %s26, [#allocation3], 256, 256, 16
    $region17: #{mlp_forward.1} parent=1 // pred_fallthru
      _
    // Predicated region
    $region18: #{mlp_forward.1} parent=1 // pred_check
      _
    $region19: #{mlp_forward.1} parent=1 // pred_check_branch
      %33 = sbr.rel (0) target = $region21
    $region20: #{mlp_forward.1} parent=1 // pred_region
      _
    $region21: #{mlp_forward.1} parent=1 // pred_fallthru
      _
    // Predicated region
    $region22: #{mlp_forward.1} parent=1 // pred_check
      _
    $region23: #{mlp_forward.1} parent=1 // pred_check_branch
      %35 = sbr.rel (0) target = $region25
    $region24: #{mlp_forward.1} parent=1 // pred_region
      _
    $region25: #{mlp_forward.1} parent=1 // pred_fallthru
      _
    // Predicated region
    $region26: #{mlp_forward.1} parent=1 // pred_check
      _
    $region27: #{mlp_forward.1} parent=1 // pred_check_branch
      %37 = sbr.rel (0) target = $region29
    $region28: #{mlp_forward.1} parent=1 // pred_region
      _
    $region29: #{mlp_forward.1} parent=1 // pred_fallthru
      _
    // Predicated region
    $region30: #{mlp_forward.1} parent=1 // pred_check
      _
    $region31: #{mlp_forward.1} parent=1 // pred_check_branch
      %39 = sbr.rel (0) target = $region33
    $region32: #{mlp_forward.1} parent=1 // pred_region
      %40 = dma.done [#allocation3], 6400
    $region33: #{mlp_forward.1} parent=1 // pred_fallthru
      _
    %v41 = vld [vmem:[%s0] sm:$0xff]
    %v42 = vld [vmem:[%s1] sm:$0xff]
    %v43 = vld [vmem:[%s1 + $0x8] sm:$0xff]
    %v44 = vld [vmem:[%s1 + $0x10] sm:$0xff]
    %v45 = vld [vmem:[%s1 + $0x18] sm:$0xff]
    %v46 = vld [vmem:[%s1 + $0x20] sm:$0xff]
    %v47 = vld [vmem:[%s1 + $0x28] sm:$0xff]
    %v48 = vld [vmem:[%s1 + $0x30] sm:$0xff]
    %v49 = vld [vmem:[%s1 + $0x38] sm:$0xff]
    %v50 = vld [vmem:[%s2] sm:$0x3]
    %v52 = vlaneseq
    %v53 = vshrl.u32 %v52, 7
    %v54 = vsub.s32 0, %v53
    %v55 = vrot.slane %v50, %v54
    %v56 = vlaneseq
    %v57 = vshrl.u32 %v56, 7
    %v58 = vsub.s32 1, %v57
    %v59 = vrot.slane %v50, %v58
    %vm62 = vcmask 261120
    %v64 = vsel %vm62, %v41, 0
    %66 = vmatprep.subr.mxu0 %v43
    %67 = vmatpush1.msra.mxu0 %v42
    %68 = vmatprep.subr.mxu0 %v45
    %69 = vmatpush1.msra.mxu0 %v44
    %70 = vmatprep.subr.mxu0 %v47
    %71 = vmatpush1.msra.mxu0 %v46
    %72 = vmatprep.subr.mxu0 %v49
    %73 = vmatpush1.msra.mxu0 %v48
    %74 = vmatprep.subr.mxu0 0.0
    %75 = vmatpush1.msra.mxu0 0.0
    %76 = vmatprep.subr.mxu0 0.0
    %77 = vmatpush1.msra.mxu0 0.0
    %78 = vmatprep.subr.mxu0 0.0
    %79 = vmatpush1.msra.mxu0 0.0
    %80 = vmatprep.subr.mxu0 0.0
    %81 = vmatpush1.msra.mxu0 0.0
    %82 = vmatprep.subr.mxu0 0.0
    %83 = vmatpush1.msra.mxu0 0.0
    %84 = vmatprep.subr.mxu0 0.0
    %85 = vmatpush1.msra.mxu0 0.0
    %86 = vmatprep.subr.mxu0 0.0
    %87 = vmatpush1.msra.mxu0 0.0
    %88 = vmatprep.subr.mxu0 0.0
    %89 = vmatpush1.msra.mxu0 0.0
    %90 = vmatprep.subr.mxu0 0.0
    %91 = vmatpush1.msra.mxu0 0.0
    %92 = vmatprep.subr.mxu0 0.0
    %93 = vmatpush1.msra.mxu0 0.0
    %94 = vmatprep.subr.mxu0 0.0
    %95 = vmatpush1.msra.mxu0 0.0
    %96 = vmatprep.subr.mxu0 0.0
    %97 = vmatpush1.msra.mxu0 0.0
    %98 = vmatprep.subr.mxu0 0.0
    %99 = vmatpush1.msra.mxu0 0.0
    %100 = vmatprep.subr.mxu0 0.0
    %101 = vmatpush1.msra.mxu0 0.0
    %102 = vmatprep.subr.mxu0 0.0
    %103 = vmatpush1.msra.mxu0 0.0
    %104 = vmatprep.subr.mxu0 0.0
    %105 = vmatpush1.msra.mxu0 0.0
    %106 = vmatprep.subr.mxu0 0.0
    %107 = vmatpush1.msra.mxu0 0.0
    %108 = vmatprep.subr.mxu0 0.0
    %109 = vmatpush1.msra.mxu0 0.0
    %110 = vmatprep.subr.mxu0 0.0
    %111 = vmatpush1.msra.mxu0 0.0
    %112 = vmatprep.subr.mxu0 0.0
    %113 = vmatpush1.msra.mxu0 0.0
    %114 = vmatprep.subr.mxu0 0.0
    %115 = vmatpush1.msra.mxu0 0.0
    %116 = vmatprep.subr.mxu0 0.0
    %117 = vmatpush1.msra.mxu0 0.0
    %118 = vmatprep.subr.mxu0 0.0
    %119 = vmatpush1.msra.mxu0 0.0
    %120 = vmatprep.subr.mxu0 0.0
    %121 = vmatpush1.msra.mxu0 0.0
    %122 = vmatprep.subr.mxu0 0.0
    %123 = vmatpush1.msra.mxu0 0.0
    %124 = vmatprep.subr.mxu0 0.0
    %125 = vmatpush1.msra.mxu0 0.0
    %126 = vmatprep.subr.mxu0 0.0
    %127 = vmatpush1.msra.mxu0 0.0
    %128 = vmatprep.subr.mxu0 0.0
    %129 = vmatpush1.msra.mxu0 0.0
    %130 = vmatprep.mubr.f32.mxu0 0.0
    %131 = vmatmul.mubr.f32.gmra.mrb[0].mxu0 %v64
    %v132 = vpop.f32.mrb[0].mxu0
    %v133 = vadd.f32 %v55, %v132
    %v134 = vpop.f32.mrb[0].mxu0
    %v135 = vadd.f32 %v59, %v134
    %136 = vdwg.mxu0
    %v137 = vmax.f32 %v133, 0.0
    %v138 = vmax.f32 %v135, 0.0
    %v139 = vld [vmem:[#allocation2] sm:$0xff]
    %v140 = vld [vmem:[#allocation2 + $0x8] sm:$0xff]
    %v141 = vld [vmem:[#allocation2 + $0x10] sm:$0xff]
    %v142 = vld [vmem:[#allocation2 + $0x18] sm:$0xff]
    %v143 = vld [vmem:[#allocation2 + $0x20] sm:$0xff]
    %v144 = vld [vmem:[#allocation2 + $0x28] sm:$0xff]
    %v145 = vld [vmem:[#allocation2 + $0x30] sm:$0xff]
    %v146 = vld [vmem:[#allocation2 + $0x38] sm:$0xff]
    %v147 = vld [vmem:[#allocation2 + $0x40] sm:$0xff]
    %v148 = vld [vmem:[#allocation2 + $0x48] sm:$0xff]
    %v149 = vld [vmem:[#allocation2 + $0x50] sm:$0xff]
    %v150 = vld [vmem:[#allocation2 + $0x58] sm:$0xff]
    %v151 = vld [vmem:[#allocation2 + $0x60] sm:$0xff]
    %v152 = vld [vmem:[#allocation2 + $0x68] sm:$0xff]
    %v153 = vld [vmem:[#allocation2 + $0x70] sm:$0xff]
    %v154 = vld [vmem:[#allocation2 + $0x78] sm:$0xff]
    %v155 = vld [vmem:[#allocation2 + $0x80] sm:$0xff]
    %v156 = vld [vmem:[#allocation2 + $0x88] sm:$0xff]
    %v157 = vld [vmem:[#allocation2 + $0x90] sm:$0xff]
    %v158 = vld [vmem:[#allocation2 + $0x98] sm:$0xff]
    %v159 = vld [vmem:[#allocation2 + $0xa0] sm:$0xff]
    %v160 = vld [vmem:[#allocation2 + $0xa8] sm:$0xff]
    %v161 = vld [vmem:[#allocation2 + $0xb0] sm:$0xff]
    %v162 = vld [vmem:[#allocation2 + $0xb8] sm:$0xff]
    %v163 = vld [vmem:[#allocation2 + $0xc0] sm:$0xff]
    %v164 = vld [vmem:[#allocation2 + $0xc8] sm:$0xff]
    %v165 = vld [vmem:[#allocation2 + $0xd0] sm:$0xff]
    %v166 = vld [vmem:[#allocation2 + $0xd8] sm:$0xff]
    %v167 = vld [vmem:[#allocation2 + $0xe0] sm:$0xff]
    %v168 = vld [vmem:[#allocation2 + $0xe8] sm:$0xff]
    %v169 = vld [vmem:[#allocation2 + $0xf0] sm:$0xff]
    %v170 = vld [vmem:[#allocation2 + $0xf8] sm:$0xff]
    %v171 = vld [vmem:[#allocation2 + $0x100] sm:$0xff]
    %v172 = vld [vmem:[#allocation2 + $0x108] sm:$0xff]
    %v173 = vld [vmem:[#allocation2 + $0x110] sm:$0xff]
    %v174 = vld [vmem:[#allocation2 + $0x118] sm:$0xff]
    %v175 = vld [vmem:[#allocation2 + $0x120] sm:$0xff]
    %v176 = vld [vmem:[#allocation2 + $0x128] sm:$0xff]
    %v177 = vld [vmem:[#allocation2 + $0x130] sm:$0xff]
    %v178 = vld [vmem:[#allocation2 + $0x138] sm:$0xff]
    %v179 = vld [vmem:[#allocation2 + $0x140] sm:$0xff]
    %v180 = vld [vmem:[#allocation2 + $0x148] sm:$0xff]
    %v181 = vld [vmem:[#allocation2 + $0x150] sm:$0xff]
    %v182 = vld [vmem:[#allocation2 + $0x158] sm:$0xff]
    %v183 = vld [vmem:[#allocation2 + $0x160] sm:$0xff]
    %v184 = vld [vmem:[#allocation2 + $0x168] sm:$0xff]
    %v185 = vld [vmem:[#allocation2 + $0x170] sm:$0xff]
    %v186 = vld [vmem:[#allocation2 + $0x178] sm:$0xff]
    %v187 = vld [vmem:[#allocation2 + $0x180] sm:$0xff]
    %v188 = vld [vmem:[#allocation2 + $0x188] sm:$0xff]
    %v189 = vld [vmem:[%s4] sm:$0x3]
    %v191 = vlaneseq
    %v192 = vshrl.u32 %v191, 7
    %v193 = vsub.s32 0, %v192
    %v194 = vrot.slane %v189, %v193
    %v195 = vlaneseq
    %v196 = vshrl.u32 %v195, 7
    %v197 = vsub.s32 1, %v196
    %v198 = vrot.slane %v189, %v197
    %vm201 = vcmask 588800
    %v203 = vsel %vm201, %v138, 0
    %205 = vmatprep.subr.mxu0 %v140
    %206 = vmatpush1.msra.mxu0 %v139
    %207 = vmatprep.subr.mxu0 %v142
    %208 = vmatpush1.msra.mxu0 %v141
    %209 = vmatprep.subr.mxu0 %v144
    %210 = vmatpush1.msra.mxu0 %v143
    %211 = vmatprep.subr.mxu0 %v146
    %212 = vmatpush1.msra.mxu0 %v145
    %213 = vmatprep.subr.mxu0 %v148
    %214 = vmatpush1.msra.mxu0 %v147
    %215 = vmatprep.subr.mxu0 %v150
    %216 = vmatpush1.msra.mxu0 %v149
    %217 = vmatprep.subr.mxu0 %v152
    %218 = vmatpush1.msra.mxu0 %v151
    %219 = vmatprep.subr.mxu0 %v154
    %220 = vmatpush1.msra.mxu0 %v153
    %221 = vmatprep.subr.mxu0 %v156
    %222 = vmatpush1.msra.mxu0 %v155
    %223 = vmatprep.subr.mxu0 %v158
    %224 = vmatpush1.msra.mxu0 %v157
    %225 = vmatprep.subr.mxu0 %v160
    %226 = vmatpush1.msra.mxu0 %v159
    %227 = vmatprep.subr.mxu0 %v162
    %228 = vmatpush1.msra.mxu0 %v161
    %229 = vmatprep.subr.mxu0 %v164
    %230 = vmatpush1.msra.mxu0 %v163
    %231 = vmatprep.subr.mxu0 %v166
    %232 = vmatpush1.msra.mxu0 %v165
    %233 = vmatprep.subr.mxu0 %v168
    %234 = vmatpush1.msra.mxu0 %v167
    %235 = vmatprep.subr.mxu0 %v170
    %236 = vmatpush1.msra.mxu0 %v169
    %237 = vmatprep.subr.mxu0 %v172
    %238 = vmatpush1.msra.mxu0 %v171
    %239 = vmatprep.subr.mxu0 %v174
    %240 = vmatpush1.msra.mxu0 %v173
    %241 = vmatprep.subr.mxu0 %v176
    %242 = vmatpush1.msra.mxu0 %v175
    %243 = vmatprep.subr.mxu0 %v178
    %244 = vmatpush1.msra.mxu0 %v177
    %245 = vmatprep.subr.mxu0 %v180
    %246 = vmatpush1.msra.mxu0 %v179
    %247 = vmatprep.subr.mxu0 %v182
    %248 = vmatpush1.msra.mxu0 %v181
    %249 = vmatprep.subr.mxu0 %v184
    %250 = vmatpush1.msra.mxu0 %v183
    %251 = vmatprep.subr.mxu0 %v186
    %252 = vmatpush1.msra.mxu0 %v185
    %253 = vmatprep.subr.mxu0 %v188
    %254 = vmatpush1.msra.mxu0 %v187
    %255 = vmatprep.subr.mxu0 0.0
    %256 = vmatpush1.msra.mxu0 0.0
    %257 = vmatprep.subr.mxu0 0.0
    %258 = vmatpush1.msra.mxu0 0.0
    %259 = vmatprep.subr.mxu0 0.0
    %260 = vmatpush1.msra.mxu0 0.0
    %261 = vmatprep.subr.mxu0 0.0
    %262 = vmatpush1.msra.mxu0 0.0
    %263 = vmatprep.subr.mxu0 0.0
    %264 = vmatpush1.msra.mxu0 0.0
    %265 = vmatprep.subr.mxu0 0.0
    %266 = vmatpush1.msra.mxu0 0.0
    %267 = vmatprep.subr.mxu0 0.0
    %268 = vmatpush1.msra.mxu0 0.0
    %269 = vmatprep.mubr.f32.mxu0 %v203
    %270 = vmatmul.mubr.f32.gmra.mrb[0].mxu0 %v137
    %v271 = vpop.f32.mrb[0].mxu0
    %v272 = vadd.f32 %v194, %v271
    %v273 = vpop.f32.mrb[0].mxu0
    %v274 = vadd.f32 %v198, %v273
    %275 = vdwg.mxu0
    %v276 = vmax.f32 %v272, 0.0
    %v277 = vmax.f32 %v274, 0.0
    %v278 = vld [vmem:[%s5] sm:$0xff]
    %v279 = vld [vmem:[%s5 + $0x8] sm:$0xff]
    %v280 = vld [vmem:[%s5 + $0x10] sm:$0xff]
    %v281 = vld [vmem:[%s5 + $0x18] sm:$0xff]
    %v282 = vld [vmem:[%s5 + $0x20] sm:$0xff]
    %v283 = vld [vmem:[%s5 + $0x28] sm:$0xff]
    %v284 = vld [vmem:[%s5 + $0x30] sm:$0xff]
    %v285 = vld [vmem:[%s5 + $0x38] sm:$0xff]
    %v286 = vld [vmem:[%s5 + $0x40] sm:$0xff]
    %v287 = vld [vmem:[%s5 + $0x48] sm:$0xff]
    %v288 = vld [vmem:[%s5 + $0x50] sm:$0xff]
    %v289 = vld [vmem:[%s5 + $0x58] sm:$0xff]
    %v290 = vld [vmem:[%s5 + $0x60] sm:$0xff]
    %v291 = vld [vmem:[%s5 + $0x68] sm:$0xff]
    %v292 = vld [vmem:[%s5 + $0x70] sm:$0xff]
    %v293 = vld [vmem:[%s5 + $0x78] sm:$0xff]
    %v294 = vld [vmem:[%s5 + $0x80] sm:$0xff]
    %v295 = vld [vmem:[%s5 + $0x88] sm:$0xff]
    %v296 = vld [vmem:[%s5 + $0x90] sm:$0xff]
    %v297 = vld [vmem:[%s5 + $0x98] sm:$0xff]
    %v298 = vld [vmem:[%s5 + $0xa0] sm:$0xff]
    %v299 = vld [vmem:[%s5 + $0xa8] sm:$0xff]
    %v300 = vld [vmem:[%s5 + $0xb0] sm:$0xff]
    %v301 = vld [vmem:[%s5 + $0xb8] sm:$0xff]
    %v302 = vld [vmem:[%s5 + $0xc0] sm:$0xff]
    %v303 = vld [vmem:[%s6] sm:$0x1]
    %v305 = vlaneseq
    %v306 = vshrl.u32 %v305, 7
    %v307 = vsub.s32 0, %v306
    %v308 = vrot.slane %v303, %v307
    %v311 = vsel %vm201, %v277, 0
    %313 = vmatprep.subr.mxu0 0.0
    %314 = vmatpush1.msra.mxu0 %v278
    %315 = vmatprep.subr.mxu0 0.0
    %316 = vmatpush1.msra.mxu0 %v279
    %317 = vmatprep.subr.mxu0 0.0
    %318 = vmatpush1.msra.mxu0 %v280
    %319 = vmatprep.subr.mxu0 0.0
    %320 = vmatpush1.msra.mxu0 %v281
    %321 = vmatprep.subr.mxu0 0.0
    %322 = vmatpush1.msra.mxu0 %v282
    %323 = vmatprep.subr.mxu0 0.0
    %324 = vmatpush1.msra.mxu0 %v283
    %325 = vmatprep.subr.mxu0 0.0
    %326 = vmatpush1.msra.mxu0 %v284
    %327 = vmatprep.subr.mxu0 0.0
    %328 = vmatpush1.msra.mxu0 %v285
    %329 = vmatprep.subr.mxu0 0.0
    %330 = vmatpush1.msra.mxu0 %v286
    %331 = vmatprep.subr.mxu0 0.0
    %332 = vmatpush1.msra.mxu0 %v287
    %333 = vmatprep.subr.mxu0 0.0
    %334 = vmatpush1.msra.mxu0 %v288
    %335 = vmatprep.subr.mxu0 0.0
    %336 = vmatpush1.msra.mxu0 %v289
    %337 = vmatprep.subr.mxu0 0.0
    %338 = vmatpush1.msra.mxu0 %v290
    %339 = vmatprep.subr.mxu0 0.0
    %340 = vmatpush1.msra.mxu0 %v291
    %341 = vmatprep.subr.mxu0 0.0
    %342 = vmatpush1.msra.mxu0 %v292
    %343 = vmatprep.subr.mxu0 0.0
    %344 = vmatpush1.msra.mxu0 %v293
    %345 = vmatprep.subr.mxu0 0.0
    %346 = vmatpush1.msra.mxu0 %v294
    %347 = vmatprep.subr.mxu0 0.0
    %348 = vmatpush1.msra.mxu0 %v295
    %349 = vmatprep.subr.mxu0 0.0
    %350 = vmatpush1.msra.mxu0 %v296
    %351 = vmatprep.subr.mxu0 0.0
    %352 = vmatpush1.msra.mxu0 %v297
    %353 = vmatprep.subr.mxu0 0.0
    %354 = vmatpush1.msra.mxu0 %v298
    %355 = vmatprep.subr.mxu0 0.0
    %356 = vmatpush1.msra.mxu0 %v299
    %357 = vmatprep.subr.mxu0 0.0
    %358 = vmatpush1.msra.mxu0 %v300
    %359 = vmatprep.subr.mxu0 0.0
    %360 = vmatpush1.msra.mxu0 %v301
    %361 = vmatprep.subr.mxu0 0.0
    %362 = vmatpush1.msra.mxu0 %v302
    %363 = vmatprep.subr.mxu0 0.0
    %364 = vmatpush1.msra.mxu0 0.0
    %365 = vmatprep.subr.mxu0 0.0
    %366 = vmatpush1.msra.mxu0 0.0
    %367 = vmatprep.subr.mxu0 0.0
    %368 = vmatpush1.msra.mxu0 0.0
    %369 = vmatprep.subr.mxu0 0.0
    %370 = vmatpush1.msra.mxu0 0.0
    %371 = vmatprep.subr.mxu0 0.0
    %372 = vmatpush1.msra.mxu0 0.0
    %373 = vmatprep.subr.mxu0 0.0
    %374 = vmatpush1.msra.mxu0 0.0
    %375 = vmatprep.subr.mxu0 0.0
    %376 = vmatpush1.msra.mxu0 0.0
    %377 = vmatprep.mubr.f32.mxu0 %v311
    %378 = vmatmul.mubr.f32.gmra.mrb[0].mxu0 %v276
    %v379 = vpop.f32.mrb[0].mxu0
    %v380 = vadd.f32 %v308, %v379
    %v381 = vpop.f32.mrb[0].mxu0
    %382 = vdwg.mxu0
    %vm383 = vcmask 80896
    %384 = vst.msk [vmem:[#allocation5] sm:$0xff] %vm383, %v380
    // Predicated region
    $region34: #{mlp_forward.1} parent=1 // pred_check
      _
    $region35: #{mlp_forward.1} parent=1 // pred_check_branch
      %386 = sbr.rel (0) target = $region37
    $region36: #{mlp_forward.1} parent=1 // pred_region
      %s388 = ssub.s32 128, 128
      %389 = vsyncadd [#allocation4], %s388
      %s391 = sshll.u32 [#allocation5], 4
      %s392 = int_to_ptr.vmem [resolvable:$true] %s391
      %394 = dma.vmem_to_hbm [thread:$0]  %s392, 128, %s7, [#allocation4]
    $region37: #{mlp_forward.1} parent=1 // pred_fallthru
      _
    // Predicated region
    $region38: #{mlp_forward.1} parent=1 // pred_check
      _
    $region39: #{mlp_forward.1} parent=1 // pred_check_branch
      %396 = sbr.rel (0) target = $region41
    $region40: #{mlp_forward.1} parent=1 // pred_region
      %397 = dma.done [#allocation4], 128
    $region41: #{mlp_forward.1} parent=1 // pred_fallthru
      _
    %398 = vsyncpa [#allocation3], 1
    %399 = vsyncpa [#allocation4], 1

</llo_original>
